<compile_context>
chip_gen: v7x
topology: tpu7x:2x2x1
jax: 0.10.0
libtpu: 0.0.40
codegen_flags: <defaults>
</compile_context>

<pallas_src>
import functools

import jax
import jax.numpy as jnp
from jax.experimental import pallas as pl
from jax.experimental.pallas import tpu as pltpu

EPS = 1e-5
VMEM_LIMIT_BYTES = 32 * 1024 * 1024      # explicit scoped-VMEM limit (safe on v5e/v6e/v7x)
VMEM_TILE_BUDGET = 24 << 20              # in-flight double-buffered tile budget


def _pass1_kernel(x_ref, w_ref, y_ref, stats_ref, *, m_total, tm):
    """ReLU -> block-diagonal 1x1-conv matmul; accumulate per-channel sum / sumsq."""
    i = pl.program_id(0)

    @pl.when(i == 0)
    def _init():
        stats_ref[...] = jnp.zeros_like(stats_ref)

    x = jnp.maximum(x_ref[...], 0.0)                                  # ReLU (VPU)
    y = jnp.dot(x, w_ref[...], preferred_element_type=jnp.float32)    # 1x1 convs (MXU)

    if m_total % tm == 0:
        yv = y
    else:
        # Mask rows of the partial last tile out of the statistics.
        rows = i * tm + jax.lax.broadcasted_iota(jnp.int32, (tm, 1), 0)
        yv = jnp.where(rows < m_total, y, 0.0)

    s = jnp.sum(yv, axis=0, keepdims=True)          # (1, C_out)
    q = jnp.sum(yv * yv, axis=0, keepdims=True)     # (1, C_out)
    stats_ref[...] = stats_ref[...] + jnp.concatenate([s, q], axis=0)

    y_ref[...] = y.astype(y_ref.dtype)


def _pass2_kernel(y_ref, ss_ref, o_ref):
    """Apply folded BatchNorm: o = y * scale + shift (one FMA per element)."""
    scale = ss_ref[0:1, :]
    shift = ss_ref[1:2, :]
    o_ref[...] = (y_ref[...] * scale + shift).astype(o_ref.dtype)


def _round_up(a, b):
    return (a + b - 1) // b * b


@jax.jit
def double_factorized_reduce(x, w1, w2, gamma, beta, *, eps=EPS):
    """x: (N, C_in, H, W) f32; w1/w2: (C_out//2, C_in, 1, 1); gamma/beta: (C_out,)."""
    N, C_in, H, W = x.shape
    C_half = w1.shape[0]
    C_out = 2 * C_half
    K = 2 * C_in

    ho1, wo1 = (H - 1) // 4 + 1, (W - 1) // 4 + 1
    ho2, wo2 = (H - 2) // 4 + 1, (W - 2) // 4 + 1
    assert (ho1, wo1) == (ho2, wo2), "spatial dims must match for channel concat"
    Hout, Wout = ho1, wo1
    M = N * Hout * Wout

    # --- wrapper glue: one NCHW->NHWC transpose, both stride-4 gathers from it ---
    x_nhwc = jnp.transpose(x, (0, 2, 3, 1))
    x1 = x_nhwc[:, 0::4, 0::4, :].reshape(M, C_in)    # conv_1 samples (0, 4, 8, ...)
    x2 = x_nhwc[:, 1::4, 1::4, :].reshape(M, C_in)    # conv_2 samples of x[:, :, 1:, 1:]
    Xc = jnp.concatenate([x1, x2], axis=-1)           # (M, 2*C_in)

    # Block-diagonal weight: one MXU matmul, one lane-dense (M, C_out) output.
    W1m = jnp.transpose(w1.reshape(C_half, C_in)).astype(jnp.float32)   # (C_in, C_half)
    W2m = jnp.transpose(w2.reshape(C_half, C_in)).astype(jnp.float32)
    z = jnp.zeros((C_in, C_half), jnp.float32)
    Wb = jnp.concatenate(
        [jnp.concatenate([W1m, z], axis=1),
         jnp.concatenate([z, W2m], axis=1)], axis=0)                     # (K, C_out)

    # --- tile size: multiple of 8, capped by VMEM budget and by M -----------------
    bytes_per_row = 4 * (K + 2 * C_out)              # x-tile + y/o-tiles per row (f32)
    tm = min(1024, max(8, (VMEM_TILE_BUDGET // (2 * bytes_per_row)) // 8 * 8))
    tm = min(tm, _round_up(M, 8))
    num_tiles = pl.cdiv(M, tm)

    # --- pass 1: y = relu(Xc) @ Wb, plus cross-tile per-channel sum / sumsq -------
    kernel1 = functools.partial(_pass1_kernel, m_total=M, tm=tm)
    y, stats = pl.pallas_call(
        kernel1,
        grid=(num_tiles,),
        in_specs=[
            pl.BlockSpec((tm, K), lambda i: (i, 0)),          # Xc tile (pipelined)
            pl.BlockSpec((K, C_out), lambda i: (0, 0)),        # weight (resident)
        ],
        out_specs=(
            pl.BlockSpec((tm, C_out), lambda i: (i, 0)),       # y tile (pipelined)
            pl.BlockSpec((2, C_out), lambda i: (0, 0)),        # stats accumulator
        ),
        out_shape=(
            jax.ShapeDtypeStruct((M, C_out), jnp.float32),
            jax.ShapeDtypeStruct((2, C_out), jnp.float32),
        ),
        compiler_params=pltpu.CompilerParams(
            dimension_semantics=("arbitrary",),                # stats accumulate over M
            vmem_limit_bytes=VMEM_LIMIT_BYTES),
    )(Xc, Wb)

    # --- tiny JAX glue: fold BN into per-channel scale/shift ----------------------
    count = jnp.float32(M)
    mean = stats[0] / count
    var = jnp.maximum(stats[1] / count - mean * mean, 0.0)     # biased (training-mode BN)
    scale = gamma.astype(jnp.float32) * jax.lax.rsqrt(var + eps)
    shift = beta.astype(jnp.float32) - mean * scale
    ss = jnp.stack([scale, shift], axis=0)                     # (2, C_out)

    # --- pass 2: normalize, in place (input_output_aliases), megacore-parallel ----
    out = pl.pallas_call(
        _pass2_kernel,
        grid=(num_tiles,),
        in_specs=[
            pl.BlockSpec((tm, C_out), lambda i: (i, 0)),
            pl.BlockSpec((2, C_out), lambda i: (0, 0)),
        ],
        out_specs=pl.BlockSpec((tm, C_out), lambda i: (i, 0)),
        out_shape=jax.ShapeDtypeStruct((M, C_out), jnp.float32),
        input_output_aliases={0: 0},
        compiler_params=pltpu.CompilerParams(
            dimension_semantics=("parallel",),
            vmem_limit_bytes=VMEM_LIMIT_BYTES),
    )(y, ss)

    # Back to NCHW.
    return jnp.transpose(out.reshape(N, Hout, Wout, C_out), (0, 3, 1, 2))


def _reference(x, w1, w2, gamma, beta, eps=EPS):
    """Pure-JAX reference mirroring the PyTorch forward (training-mode BN)."""
    C_half, C_in = w1.shape[0], w1.shape[1]
    xr = jnp.maximum(x, 0.0)
    y1 = jnp.einsum("nchw,oc->nohw", xr[:, :, ::4, ::4], w1.reshape(C_half, C_in))
    y2 = jnp.einsum("nchw,oc->nohw", xr[:, :, 1::4, 1::4], w2.reshape(C_half, C_in))
    y = jnp.concatenate([y1, y2], axis=1)
    mean = y.mean(axis=(0, 2, 3), keepdims=True)
    var = jnp.square(y - mean).mean(axis=(0, 2, 3), keepdims=True)
    return ((y - mean) * jax.lax.rsqrt(var + eps)
            * gamma.reshape(1, -1, 1, 1) + beta.reshape(1, -1, 1, 1))


if __name__ == "__main__":
    N, C_in, H, W = 2, 4, 16, 16
    C_out = 8
    C_half = C_out // 2

    key = jax.random.PRNGKey(0)
    kx, kw1, kw2 = jax.random.split(key, 3)

    x = jax.random.normal(kx, (N, C_in, H, W), dtype=jnp.float32)
    w1 = jax.random.normal(kw1, (C_half, C_in, 1, 1), dtype=jnp.float32) * 0.5
    w2 = jax.random.normal(kw2, (C_half, C_in, 1, 1), dtype=jnp.float32) * 0.5
    gamma = jnp.ones((C_out,), dtype=jnp.float32)   # BN affine weight init
    beta = jnp.zeros((C_out,), dtype=jnp.float32)   # BN affine bias init

    out = double_factorized_reduce(x, w1, w2, gamma, beta)
    out = jax.block_until_ready(out)

    ref = _reference(x, w1, w2, gamma, beta)
    assert out.shape == (N, C_out, H // 4, W // 4), out.shape
    assert jnp.allclose(out, ref, atol=1e-4, rtol=1e-4), \
        float(jnp.max(jnp.abs(out - ref)))

    print("KERNEL_OK")
</pallas_src>

<mosaic_0001>
module attributes {stable_mosaic.version = 11 : i64} {
  func.func @_pass2_kernel(%arg0: i32, %arg1: memref<32x8xf32, #tpu.memory_space<vmem>>, %arg2: memref<2x8xf32, #tpu.memory_space<vmem>>, %arg3: memref<32x8xf32, #tpu.memory_space<vmem>>) attributes {dimension_semantics = [#tpu.dimension_semantics<parallel>], iteration_bounds = array<i64: 1>, scalar_prefetch = 0 : i64, scratch_operands = 0 : i64, tpu.core_type = #tpu.core_type<tc>, window_params = [{transform_indices = @transform_0, window_bounds = array<i64: 32, 8>}, {pipeline_mode = #tpu.pipeline_mode<synchronous>, transform_indices = @transform_1, window_bounds = array<i64: 2, 8>}, {transform_indices = @transform_2, window_bounds = array<i64: 32, 8>}]} {
    %c0 = arith.constant 0 : index
    %c0_0 = arith.constant 0 : index
    %0 = vector.load %arg2[%c0, %c0_0] : memref<2x8xf32, #tpu.memory_space<vmem>>, vector<1x8xf32>
    %c1 = arith.constant 1 : index
    %c0_1 = arith.constant 0 : index
    %1 = vector.load %arg2[%c1, %c0_1] : memref<2x8xf32, #tpu.memory_space<vmem>>, vector<1x8xf32>
    %c0_2 = arith.constant 0 : index
    %c0_3 = arith.constant 0 : index
    %2 = vector.load %arg1[%c0_2, %c0_3] : memref<32x8xf32, #tpu.memory_space<vmem>>, vector<32x8xf32>
    %3 = vector.broadcast %0 : vector<1x8xf32> to vector<32x8xf32>
    %4 = arith.mulf %2, %3 : vector<32x8xf32>
    %5 = vector.broadcast %1 : vector<1x8xf32> to vector<32x8xf32>
    %6 = arith.addf %4, %5 : vector<32x8xf32>
    %c0_4 = arith.constant 0 : index
    %c0_5 = arith.constant 0 : index
    %7 = vector.load %arg3[%c0_4, %c0_5] : memref<32x8xf32, #tpu.memory_space<vmem>>, vector<32x8xf32>
    tpu.vector_store %arg3[%c0_4, %c0_5], %6 {strides = array<i32>} : memref<32x8xf32, #tpu.memory_space<vmem>>, vector<32x8xf32>,
    return
  }
  func.func @transform_0(%arg0: i32) -> (i32, i32) {
    %c0_i32 = arith.constant 0 : i32
    %c0_i32_0 = arith.constant 0 : i32
    return %arg0, %c0_i32 : i32, i32
  }
  func.func @transform_1(%arg0: i32) -> (i32, i32) {
    %c0_i32 = arith.constant 0 : i32
    %c0_i32_0 = arith.constant 0 : i32
    %c0_i32_1 = arith.constant 0 : i32
    return %c0_i32, %c0_i32_0 : i32, i32
  }
  func.func @transform_2(%arg0: i32) -> (i32, i32) {
    %c0_i32 = arith.constant 0 : i32
    %c0_i32_0 = arith.constant 0 : i32
    return %arg0, %c0_i32 : i32, i32
  }
}

module attributes {stable_mosaic.version = 11 : i64} {
  func.func @_pass1_kernel(%arg0: i32, %arg1: memref<32x8xf32, #tpu.memory_space<vmem>>, %arg2: memref<8x8xf32, #tpu.memory_space<vmem>>, %arg3: memref<32x8xf32, #tpu.memory_space<vmem>>, %arg4: memref<2x8xf32, #tpu.memory_space<vmem>>) attributes {dimension_semantics = [#tpu.dimension_semantics<arbitrary>], iteration_bounds = array<i64: 1>, scalar_prefetch = 0 : i64, scratch_operands = 0 : i64, tpu.core_type = #tpu.core_type<tc>, window_params = [{transform_indices = @transform_0, window_bounds = array<i64: 32, 8>}, {pipeline_mode = #tpu.pipeline_mode<synchronous>, transform_indices = @transform_1, window_bounds = array<i64: 8, 8>}, {transform_indices = @transform_2, window_bounds = array<i64: 32, 8>}, {pipeline_mode = #tpu.pipeline_mode<synchronous>, transform_indices = @transform_3, window_bounds = array<i64: 2, 8>}]} {
    %c0_i32 = arith.constant 0 : i32
    %0 = arith.cmpi eq, %arg0, %c0_i32 : i32
    %1 = arith.extui %0 : i1 to i32
    %c0_i32_0 = arith.constant 0 : i32
    %2 = arith.cmpi ne, %1, %c0_i32_0 : i32
    scf.if %2 {
      %cst_13 = arith.constant 0.000000e+00 : f32
      %18 = vector.broadcast %cst_13 : f32 to vector<2x8xf32>
      %c0_14 = arith.constant 0 : index
      %c0_15 = arith.constant 0 : index
      %19 = vector.load %arg4[%c0_14, %c0_15] : memref<2x8xf32, #tpu.memory_space<vmem>>, vector<2x8xf32>
      tpu.vector_store %arg4[%c0_14, %c0_15], %18 {strides = array<i32>} : memref<2x8xf32, #tpu.memory_space<vmem>>, vector<2x8xf32>,
    } else {
    }
    %c0 = arith.constant 0 : index
    %c0_1 = arith.constant 0 : index
    %3 = vector.load %arg1[%c0, %c0_1] : memref<32x8xf32, #tpu.memory_space<vmem>>, vector<32x8xf32>
    %cst = arith.constant 0.000000e+00 : f32
    %4 = vector.broadcast %cst : f32 to vector<32x8xf32>
    %5 = arith.maximumf %3, %4 : vector<32x8xf32>
    %c0_2 = arith.constant 0 : index
    %c0_3 = arith.constant 0 : index
    %6 = vector.load %arg2[%c0_2, %c0_3] : memref<8x8xf32, #tpu.memory_space<vmem>>, vector<8x8xf32>
    %cst_4 = arith.constant dense<0.000000e+00> : vector<32x8xf32>
    %7 = tpu.matmul %5, %6, %cst_4 {dimension_numbers = #tpu.dot_dimension_numbers<[1], [0], [0], [1], [0, 0, 1, 1], [], []>} : vector<32x8xf32>, vector<8x8xf32>, vector<32x8xf32> -> vector<32x8xf32>
    %cst_5 = arith.constant dense<0.000000e+00> : vector<8xf32>
    %8 = vector.multi_reduction <add>, %7, %cst_5 [0] : vector<32x8xf32> to vector<8xf32>
    %9 = vector.shape_cast %8 : vector<8xf32> to vector<1x8xf32>
    %10 = arith.mulf %7, %7 : vector<32x8xf32>
    %cst_6 = arith.constant dense<0.000000e+00> : vector<8xf32>
    %11 = vector.multi_reduction <add>, %10, %cst_6 [0] : vector<32x8xf32> to vector<8xf32>
    %12 = vector.shape_cast %11 : vector<8xf32> to vector<1x8xf32>
    %c0_7 = arith.constant 0 : index
    %c0_8 = arith.constant 0 : index
    %13 = vector.load %arg4[%c0_7, %c0_8] : memref<2x8xf32, #tpu.memory_space<vmem>>, vector<2x8xf32>
    %14 = tpu.concatenate %9, %12 in 0 : vector<1x8xf32>, vector<1x8xf32> -> vector<2x8xf32>
    %15 = arith.addf %13, %14 : vector<2x8xf32>
    %c0_9 = arith.constant 0 : index
    %c0_10 = arith.constant 0 : index
    %16 = vector.load %arg4[%c0_9, %c0_10] : memref<2x8xf32, #tpu.memory_space<vmem>>, vector<2x8xf32>
    tpu.vector_store %arg4[%c0_9, %c0_10], %15 {strides = array<i32>} : memref<2x8xf32, #tpu.memory_space<vmem>>, vector<2x8xf32>,
    %c0_11 = arith.constant 0 : index
    %c0_12 = arith.constant 0 : index
    %17 = vector.load %arg3[%c0_11, %c0_12] : memref<32x8xf32, #tpu.memory_space<vmem>>, vector<32x8xf32>
    tpu.vector_store %arg3[%c0_11, %c0_12], %7 {strides = array<i32>} : memref<32x8xf32, #tpu.memory_space<vmem>>, vector<32x8xf32>,
    return
  }
  func.func @transform_0(%arg0: i32) -> (i32, i32) {
    %c0_i32 = arith.constant 0 : i32
    %c0_i32_0 = arith.constant 0 : i32
    return %arg0, %c0_i32 : i32, i32
  }
  func.func @transform_1(%arg0: i32) -> (i32, i32) {
    %c0_i32 = arith.constant 0 : i32
    %c0_i32_0 = arith.constant 0 : i32
    %c0_i32_1 = arith.constant 0 : i32
    return %c0_i32, %c0_i32_0 : i32, i32
  }
  func.func @transform_2(%arg0: i32) -> (i32, i32) {
    %c0_i32 = arith.constant 0 : i32
    %c0_i32_0 = arith.constant 0 : i32
    return %arg0, %c0_i32 : i32, i32
  }
  func.func @transform_3(%arg0: i32) -> (i32, i32) {
    %c0_i32 = arith.constant 0 : i32
    %c0_i32_0 = arith.constant 0 : i32
    %c0_i32_1 = arith.constant 0 : i32
    return %c0_i32, %c0_i32_0 : i32, i32
  }
}

</mosaic_0001>

<llo_original>
// kernel: double_factorized_reduce.2
$region0: #{double_factorized_reduce.2}
  #allocation0 [shape = 'u32[]', space=smem, size = 0x4, offset = 0x4, fixed_abs, tag = 'smem constant byte address 0x4 - core index']
  #allocation1 [shape = 'u32[144,128]{1,0:T(1,128)}', space=vmem, size = 0x12000, scoped, tag = 'internal scratch']
  %s0 = inlined_call_operand.vmem [shape: f32[32,8], index: 0, kind: input, shape index: {}]
  %s1 = inlined_call_operand.vmem [shape: f32[8,8], index: 1, kind: input, shape index: {}]
  %s2 = inlined_call_operand.vmem [shape: f32[32,8], index: 2, kind: output, shape index: {0}]
  %s3 = inlined_call_operand.vmem [shape: f32[2,8], index: 3, kind: output, shape index: {1}]
  %4 = xla_tuple %s2, %s3
  %s5 = sld [smem:[#allocation0]]
  $region30: #{double_factorized_reduce.2} parent=0
    _
  %s7 = ssub.s32 1, %s5
  %s8 = scalar_select 0, %s7, %s5
  // Predicated region
  $region2: #{double_factorized_reduce.2} parent=0 // pred_check
    _
  $region3: #{double_factorized_reduce.2} parent=0 // pred_check_branch
    %10 = sbr.rel (0) target = $region5
  $region4: #{double_factorized_reduce.2} parent=0 // pred_region
    _
  $region5: #{double_factorized_reduce.2} parent=0 // pred_fallthru
    _
  // Predicated region
  $region6: #{double_factorized_reduce.2} parent=0 // pred_check
    _
  $region7: #{double_factorized_reduce.2} parent=0 // pred_check_branch
    %12 = sbr.rel (0) target = $region9
  $region8: #{double_factorized_reduce.2} parent=0 // pred_region
    _
  $region9: #{double_factorized_reduce.2} parent=0 // pred_fallthru
    _
  %p13 = scmp.eq.s32.totalorder 0, 0
  // Predicated region
  $region10: #{double_factorized_reduce.2} parent=0 // pred_check
    %p14 = pneg %p13
  $region11: #{double_factorized_reduce.2} parent=0 // pred_check_branch
    %16 = sbr.rel (%p14) target = $region13
  $region12: #{double_factorized_reduce.2} parent=0 // pred_region
    %vm17 = vcmask 58368
    %18 = vst.msk [vmem:[%s3] sm:$0x3] %vm17, 0.0
  $region13: #{double_factorized_reduce.2} parent=0 // pred_fallthru
    _
  %v19 = vld [vmem:[%s0] sm:$0xff]
  %v20 = vld [vmem:[%s0 + $0x8] sm:$0xff]
  %v21 = vld [vmem:[%s0 + $0x10] sm:$0xff]
  %v22 = vld [vmem:[%s0 + $0x18] sm:$0xff]
  %v23 = vmax.f32 %v19, 0.0
  %v24 = vmax.f32 %v20, 0.0
  %v25 = vmax.f32 %v21, 0.0
  %v26 = vmax.f32 %v22, 0.0
  %v27 = vld [vmem:[%s1] sm:$0xff]
  %vm28 = vcmask 64512
  %v30 = vsel %vm28, %v23, 0
  %v33 = vsel %vm28, %v24, 0
  %v36 = vsel %vm28, %v25, 0
  %v39 = vsel %vm28, %v26, 0
  %41 = vmatprep.subr.mxu0 0.0
  %42 = vmatpush1.msra.mxu0 %v27
  %43 = vmatprep.subr.mxu0 0.0
  %44 = vmatpush1.msra.mxu0 0.0
  %45 = vmatprep.subr.mxu0 0.0
  %46 = vmatpush1.msra.mxu0 0.0
  %47 = vmatprep.subr.mxu0 0.0
  %48 = vmatpush1.msra.mxu0 0.0
  %49 = vmatprep.subr.mxu0 0.0
  %50 = vmatpush1.msra.mxu0 0.0
  %51 = vmatprep.subr.mxu0 0.0
  %52 = vmatpush1.msra.mxu0 0.0
  %53 = vmatprep.subr.mxu0 0.0
  %54 = vmatpush1.msra.mxu0 0.0
  %55 = vmatprep.subr.mxu0 0.0
  %56 = vmatpush1.msra.mxu0 0.0
  %57 = vmatprep.subr.mxu0 0.0
  %58 = vmatpush1.msra.mxu0 0.0
  %59 = vmatprep.subr.mxu0 0.0
  %60 = vmatpush1.msra.mxu0 0.0
  %61 = vmatprep.subr.mxu0 0.0
  %62 = vmatpush1.msra.mxu0 0.0
  %63 = vmatprep.subr.mxu0 0.0
  %64 = vmatpush1.msra.mxu0 0.0
  %65 = vmatprep.subr.mxu0 0.0
  %66 = vmatpush1.msra.mxu0 0.0
  %67 = vmatprep.subr.mxu0 0.0
  %68 = vmatpush1.msra.mxu0 0.0
  %69 = vmatprep.subr.mxu0 0.0
  %70 = vmatpush1.msra.mxu0 0.0
  %71 = vmatprep.subr.mxu0 0.0
  %72 = vmatpush1.msra.mxu0 0.0
  %73 = vmatprep.subr.mxu0 0.0
  %74 = vmatpush1.msra.mxu0 0.0
  %75 = vmatprep.subr.mxu0 0.0
  %76 = vmatpush1.msra.mxu0 0.0
  %77 = vmatprep.subr.mxu0 0.0
  %78 = vmatpush1.msra.mxu0 0.0
  %79 = vmatprep.subr.mxu0 0.0
  %80 = vmatpush1.msra.mxu0 0.0
  %81 = vmatprep.subr.mxu0 0.0
  %82 = vmatpush1.msra.mxu0 0.0
  %83 = vmatprep.subr.mxu0 0.0
  %84 = vmatpush1.msra.mxu0 0.0
  %85 = vmatprep.subr.mxu0 0.0
  %86 = vmatpush1.msra.mxu0 0.0
  %87 = vmatprep.subr.mxu0 0.0
  %88 = vmatpush1.msra.mxu0 0.0
  %89 = vmatprep.subr.mxu0 0.0
  %90 = vmatpush1.msra.mxu0 0.0
  %91 = vmatprep.subr.mxu0 0.0
  %92 = vmatpush1.msra.mxu0 0.0
  %93 = vmatprep.subr.mxu0 0.0
  %94 = vmatpush1.msra.mxu0 0.0
  %95 = vmatprep.subr.mxu0 0.0
  %96 = vmatpush1.msra.mxu0 0.0
  %97 = vmatprep.subr.mxu0 0.0
  %98 = vmatpush1.msra.mxu0 0.0
  %99 = vmatprep.subr.mxu0 0.0
  %100 = vmatpush1.msra.mxu0 0.0
  %101 = vmatprep.subr.mxu0 0.0
  %102 = vmatpush1.msra.mxu0 0.0
  %103 = vmatprep.subr.mxu0 0.0
  %104 = vmatpush1.msra.mxu0 0.0
  %105 = vmatprep.mubr.f32.mxu0 0.0
  %106 = vmatmul.mubr.f32.gmra.mrb[0].mxu0 %v30
  %v107 = vpop.f32.mrb[0].mxu0
  %v108 = vadd.f32 0.0, %v107
  %v109 = vpop.f32.mrb[0].mxu0
  %110 = vmatprep.mubr.f32.mxu0 0.0
  %111 = vmatmul.mubr.f32.gmra.mrb[0].mxu0 %v33
  %v112 = vpop.f32.mrb[0].mxu0
  %v113 = vadd.f32 0.0, %v112
  %v114 = vpop.f32.mrb[0].mxu0
  %115 = vmatprep.mubr.f32.mxu0 0.0
  %116 = vmatmul.mubr.f32.gmra.mrb[0].mxu0 %v36
  %v117 = vpop.f32.mrb[0].mxu0
  %v118 = vadd.f32 0.0, %v117
  %v119 = vpop.f32.mrb[0].mxu0
  %120 = vmatprep.mubr.f32.mxu0 0.0
  %121 = vmatmul.mubr.f32.gmra.mrb[0].mxu0 %v39
  %v122 = vpop.f32.mrb[0].mxu0
  %v123 = vadd.f32 0.0, %v122
  %v124 = vpop.f32.mrb[0].mxu0
  %125 = vdwg.mxu0
  %v126 = vsel %vm28, %v108, 0.0
  %v127 = vsel %vm28, %v113, 0.0
  %v128 = vadd.f32 %v126, %v127
  %v129 = vsel %vm28, %v118, 0.0
  %v130 = vadd.f32 %v128, %v129
  %v131 = vsel %vm28, %v123, 0.0
  %v132 = vadd.f32 %v130, %v131
  %v133 = vrot.slane %v132, 4
  %v134 = vadd.f32 %v132, %v133
  %v135 = vrot.slane %v134, 2
  %v136 = vadd.f32 %v134, %v135
  %v137 = vrot.slane %v136, 1
  %v138 = vadd.f32 %v136, %v137
  %v139 = vmul.f32 %v108, %v108
  %v140 = vmul.f32 %v113, %v113
  %v141 = vmul.f32 %v118, %v118
  %v142 = vmul.f32 %v123, %v123
  %v143 = vsel %vm28, %v139, 0.0
  %v144 = vsel %vm28, %v140, 0.0
  %v145 = vadd.f32 %v143, %v144
  %v146 = vsel %vm28, %v141, 0.0
  %v147 = vadd.f32 %v145, %v146
  %v148 = vsel %vm28, %v142, 0.0
  %v149 = vadd.f32 %v147, %v148
  %v150 = vrot.slane %v149, 4
  %v151 = vadd.f32 %v149, %v150
  %v152 = vrot.slane %v151, 2
  %v153 = vadd.f32 %v151, %v152
  %v154 = vrot.slane %v153, 1
  %v155 = vadd.f32 %v153, %v154
  %v156 = vld [vmem:[%s3] sm:$0x3]
  %vm157 = vcmask 1040384
  %v158 = vsel %vm157, %v138, %v155
  %v159 = vadd.f32 %v156, %v158
  %vm160 = vcmask 58368
  %161 = vst.msk [vmem:[%s3] sm:$0x3] %vm160, %v159
  %162 = vst.msk [vmem:[%s2] sm:$0xff] %vm28, %v108
  %163 = vst.msk [vmem:[%s2 + $0x8] sm:$0xff] %vm28, %v113
  %164 = vst.msk [vmem:[%s2 + $0x10] sm:$0xff] %vm28, %v118
  %165 = vst.msk [vmem:[%s2 + $0x18] sm:$0xff] %vm28, %v123
  // Predicated region
  $region14: #{double_factorized_reduce.2} parent=0 // pred_check
    _
  $region15: #{double_factorized_reduce.2} parent=0 // pred_check_branch
    %167 = sbr.rel (0) target = $region17
  $region16: #{double_factorized_reduce.2} parent=0 // pred_region
    _
  $region17: #{double_factorized_reduce.2} parent=0 // pred_fallthru
    _
  // Predicated region
  $region18: #{double_factorized_reduce.2} parent=0 // pred_check
    _
  $region19: #{double_factorized_reduce.2} parent=0 // pred_check_branch
    %169 = sbr.rel (0) target = $region21
  $region20: #{double_factorized_reduce.2} parent=0 // pred_region
    _
  $region21: #{double_factorized_reduce.2} parent=0 // pred_fallthru
    _
  // Predicated region
  $region22: #{double_factorized_reduce.2} parent=0 // pred_check
    _
  $region23: #{double_factorized_reduce.2} parent=0 // pred_check_branch
    %171 = sbr.rel (0) target = $region25
  $region24: #{double_factorized_reduce.2} parent=0 // pred_region
    _
  $region25: #{double_factorized_reduce.2} parent=0 // pred_fallthru
    _
  // Predicated region
  $region26: #{double_factorized_reduce.2} parent=0 // pred_check
    _
  $region27: #{double_factorized_reduce.2} parent=0 // pred_check_branch
    %173 = sbr.rel (0) target = $region29
  $region28: #{double_factorized_reduce.2} parent=0 // pred_region
    _
  $region29: #{double_factorized_reduce.2} parent=0 // pred_fallthru
    _

// kernel: double_factorized_reduce.3
$region0: #{double_factorized_reduce.3}
  #allocation0 [shape = 'u32[]', space=smem, size = 0x4, offset = 0x4, fixed_abs, tag = 'smem constant byte address 0x4 - core index']
  #allocation1 [shape = 'u32[144,128]{1,0:T(1,128)}', space=vmem, size = 0x12000, scoped, tag = 'internal scratch']
  %s0 = inlined_call_operand.vmem [shape: f32[32,8], index: 0, kind: input, shape index: {}, may-alias: {0,2}]
  %s1 = inlined_call_operand.vmem [shape: f32[2,8], index: 1, kind: input, shape index: {}]
  %s2 = inlined_call_operand.vmem [shape: f32[32,8], index: 2, kind: output, shape index: {}, may-alias: {0,2}]
  %s3 = sld [smem:[#allocation0]]
  $region18: #{double_factorized_reduce.3} parent=0
    _
  %s5 = ssub.s32 1, %s3
  %s6 = scalar_select 0, %s5, %s3
  // Predicated region
  $region2: #{double_factorized_reduce.3} parent=0 // pred_check
    _
  $region3: #{double_factorized_reduce.3} parent=0 // pred_check_branch
    %8 = sbr.rel (0) target = $region5
  $region4: #{double_factorized_reduce.3} parent=0 // pred_region
    _
  $region5: #{double_factorized_reduce.3} parent=0 // pred_fallthru
    _
  // Predicated region
  $region6: #{double_factorized_reduce.3} parent=0 // pred_check
    _
  $region7: #{double_factorized_reduce.3} parent=0 // pred_check_branch
    %10 = sbr.rel (0) target = $region9
  $region8: #{double_factorized_reduce.3} parent=0 // pred_region
    _
  $region9: #{double_factorized_reduce.3} parent=0 // pred_fallthru
    _
  %v11 = vld [vmem:[%s1] sm:$0x1]
  %v12 = vld [vmem:[%s1 + $0x1] sm:$0x1]
  %v13 = vld [vmem:[%s0] sm:$0xff]
  %v14 = vld [vmem:[%s0 + $0x8] sm:$0xff]
  %v15 = vld [vmem:[%s0 + $0x10] sm:$0xff]
  %v16 = vld [vmem:[%s0 + $0x18] sm:$0xff]
  %v17 = vlaneseq
  %v18 = vshrl.u32 %v17, 7
  %v19 = vsub.s32 0, %v18
  %v20 = vrot.slane %v11, %v19
  %v21 = vmul.f32 %v13, %v20
  %v22 = vmul.f32 %v14, %v20
  %v23 = vmul.f32 %v15, %v20
  %v24 = vmul.f32 %v16, %v20
  %v25 = vlaneseq
  %v26 = vshrl.u32 %v25, 7
  %v27 = vsub.s32 0, %v26
  %v28 = vrot.slane %v12, %v27
  %v29 = vadd.f32 %v21, %v28
  %v30 = vadd.f32 %v22, %v28
  %v31 = vadd.f32 %v23, %v28
  %v32 = vadd.f32 %v24, %v28
  %vm33 = vcmask 64512
  %34 = vst.msk [vmem:[%s2] sm:$0xff] %vm33, %v29
  %35 = vst.msk [vmem:[%s2 + $0x8] sm:$0xff] %vm33, %v30
  %36 = vst.msk [vmem:[%s2 + $0x10] sm:$0xff] %vm33, %v31
  %37 = vst.msk [vmem:[%s2 + $0x18] sm:$0xff] %vm33, %v32
  // Predicated region
  $region10: #{double_factorized_reduce.3} parent=0 // pred_check
    _
  $region11: #{double_factorized_reduce.3} parent=0 // pred_check_branch
    %39 = sbr.rel (0) target = $region13
  $region12: #{double_factorized_reduce.3} parent=0 // pred_region
    _
  $region13: #{double_factorized_reduce.3} parent=0 // pred_fallthru
    _
  // Predicated region
  $region14: #{double_factorized_reduce.3} parent=0 // pred_check
    _
  $region15: #{double_factorized_reduce.3} parent=0 // pred_check_branch
    %41 = sbr.rel (0) target = $region17
  $region16: #{double_factorized_reduce.3} parent=0 // pred_region
    _
  $region17: #{double_factorized_reduce.3} parent=0 // pred_fallthru
    _

</llo_original>
